<compile_context>
chip_gen: v7x
topology: tpu7x:2x2x1
jax: 0.10.0
libtpu: 0.0.40
codegen_flags: <defaults>
</compile_context>

<pallas_src>
import functools

import jax
import jax.numpy as jnp
from jax.experimental import pallas as pl
from jax.experimental.pallas import tpu as pltpu


# ---------------------------------------------------------------------------
# Kernels
# ---------------------------------------------------------------------------

def _linear_sigmoid_2d_kernel(x_ref, w_ref, b_ref, o_ref, *, cast_bf16):
    """sigmoid(x @ w.T + b) for one (tb, tn) output tile, full-K in one shot.

    x_ref: (tb, I)   activation tile
    w_ref: (tn, I)   weight tile in PyTorch (out, in) layout
    b_ref: (1, tn)   bias tile
    o_ref: (tb, tn)  output tile
    """
    x = x_ref[...]
    w = w_ref[...]
    if cast_bf16:
        x = x.astype(jnp.bfloat16)
        w = w.astype(jnp.bfloat16)
    # Contract the last dims of x and w on the MXU (no wrapper-side transpose).
    z = jax.lax.dot_general(
        x, w,
        dimension_numbers=(((1,), (1,)), ((), ())),
        preferred_element_type=jnp.float32,
    )
    z = z + b_ref[...].astype(jnp.float32)
    o_ref[...] = jax.nn.sigmoid(z).astype(o_ref.dtype)


def _linear_sigmoid_3d_kernel(x_ref, w_ref, b_ref, o_ref, acc_ref, *, cast_bf16):
    """K-tiled variant: grid (B//tb, O//tn, I//tk) with an f32 accumulator."""
    k = pl.program_id(2)

    @pl.when(k == 0)
    def _():
        acc_ref[...] = jnp.zeros_like(acc_ref)

    x = x_ref[...]
    w = w_ref[...]
    if cast_bf16:
        x = x.astype(jnp.bfloat16)
        w = w.astype(jnp.bfloat16)
    acc_ref[...] += jax.lax.dot_general(
        x, w,
        dimension_numbers=(((1,), (1,)), ((), ())),
        preferred_element_type=jnp.float32,
    )

    @pl.when(k == pl.num_programs(2) - 1)
    def _():
        z = acc_ref[...] + b_ref[...].astype(jnp.float32)
        o_ref[...] = jax.nn.sigmoid(z).astype(o_ref.dtype)


# ---------------------------------------------------------------------------
# Hardware-aware planning helpers
# ---------------------------------------------------------------------------

@functools.lru_cache(maxsize=1)
def _tpu_params():
    """Returns (vmem_capacity_bytes, vmem_budget_bytes, lane_align, is_v7)."""
    kind = ""
    try:
        kind = jax.devices()[0].device_kind.lower()
    except Exception:
        pass
    is_v7 = ("v7" in kind) or ("7x" in kind)

    capacity = None
    try:
        capacity = int(pltpu.get_tpu_info().vmem_capacity_bytes)
    except Exception:
        capacity = None
    if capacity is None or capacity <= 0:
        if is_v7:
            capacity = 64 * 1024 * 1024           # v7x: 64 MiB per TensorCore
        elif ("v5" in kind) or ("v6" in kind):
            capacity = 128 * 1024 * 1024          # v5e / v6e: 128 MiB
        else:
            capacity = 64 * 1024 * 1024           # unknown: be conservative

    # Leave ~25% headroom for compiler-internal scratch / semaphores /
    # pipeline bookkeeping: ~48 MiB on v7x, ~96 MiB on v5e/v6e.
    budget = (capacity * 3) // 4
    # v6e/v7x MXU is 2x256x256 -> prefer 256-multiple N/K tiles; 128 on v5e.
    lane_align = 256 if (is_v7 or "v6" in kind) else 128
    return capacity, budget, lane_align, is_v7


def _sublane_align(dtype):
    itemsize = jnp.dtype(dtype).itemsize
    return {4: 8, 2: 16, 1: 32}.get(itemsize, 8)


def _pick_tile(dim, target, align):
    """Largest tile <= target that is a multiple of `align` and divides `dim`.

    If dim <= target (or no aligned divisor exists) the full dim is used,
    which always satisfies the (sublane, 128) BlockSpec rule.
    """
    if dim <= target:
        return dim
    t = (target // align) * align
    while t >= align:
        if dim % t == 0:
            return t
        t -= align
    return dim


def _plan_tiles(B, I, O, in_itemsize, out_itemsize, budget, lane_align, sub_align):
    """Pick (tb, tn, tk) sized against the per-generation VMEM budget."""

    def vmem_2d(tb, tn):
        # double-buffered x / w / bias tiles + double-buffered output tile
        return (2 * (tb * I + tn * I + tn) * in_itemsize
                + 2 * tb * tn * out_itemsize)

    def vmem_3d(tb, tn, tk):
        return (2 * (tb * tk + tn * tk + tn) * in_itemsize
                + 2 * tb * tn * out_itemsize
                + tb * tn * 4)

    # Preferred plan: contract the full input dim in one step -> pure 2-D
    # "parallel" grid, no accumulator revisit, output written exactly once.
    for tb_target in (512, 256, 128, 64, 32, 16, 8):
        tb = _pick_tile(B, tb_target, sub_align)
        for tn_target in (1024, 512, 256, 128):
            tn = _pick_tile(O, tn_target, lane_align)
            if vmem_2d(tb, tn) <= budget:
                return tb, tn, I

    # Fallback: tile the contraction dim (3-D grid + f32 accumulator).
    tb = _pick_tile(B, 256, sub_align)
    tn = _pick_tile(O, 512, lane_align)
    for tk_target in (1024, 512, 256, 128):
        tk = _pick_tile(I, tk_target, lane_align)
        if vmem_3d(tb, tn, tk) <= budget:
            return tb, tn, tk
    return tb, tn, _pick_tile(I, 128, lane_align)


def _maybe_split_parallel_plane(B, O, tb, tn, lane_align, sub_align, is_v7):
    """On v7x (2 TensorCores/chip, 'parallel' axes sharded) make sure the
    (i, j) plane has >= 2 blocks so the second core isn't idle."""
    if not is_v7 or (B // tb) * (O // tn) >= 2:
        return tb, tn
    if tn == O and O > lane_align:
        cand = _pick_tile(O, O // 2, lane_align)
        if cand < O:
            return tb, cand
    if tb == B and B > sub_align:
        cand = _pick_tile(B, B // 2, sub_align)
        if cand < B:
            return cand, tn
    return tb, tn


# ---------------------------------------------------------------------------
# Wrapper
# ---------------------------------------------------------------------------

@functools.partial(
    jax.jit, static_argnames=("tile_b", "tile_n", "tile_k", "bf16_matmul"))
def net_forward(x, weight, bias, *, tile_b=None, tile_n=None, tile_k=None,
                bf16_matmul=False):
    """sigmoid(x @ weight.T + bias)

    x:      (B, inputs)
    weight: (outputs, inputs)  -- PyTorch nn.Linear layout (never transposed)
    bias:   (outputs,)
    """
    B, I = x.shape
    O, I_w = weight.shape
    if I_w != I:
        raise ValueError(f"weight shape {weight.shape} incompatible with x {x.shape}")
    b2 = bias.reshape(1, O)

    capacity, budget, lane_align, is_v7 = _tpu_params()
    sub_align = _sublane_align(x.dtype)
    in_itemsize = jnp.dtype(x.dtype).itemsize
    out_itemsize = in_itemsize

    auto_tb, auto_tn, auto_tk = _plan_tiles(
        B, I, O, in_itemsize, out_itemsize, budget, lane_align, sub_align)
    tb = auto_tb if tile_b is None else int(tile_b)
    tn = auto_tn if tile_n is None else int(tile_n)
    tk = auto_tk if tile_k is None else int(tile_k)

    if tile_b is None and tile_n is None and tk == I:
        tb, tn = _maybe_split_parallel_plane(
            B, O, tb, tn, lane_align, sub_align, is_v7)

    # The kernels carry no boundary masking: tiles must divide the dims and
    # respect the (sublane, 128) tiling rule (auto tiles always do).
    if (B % tb) or (O % tn) or (I % tk):
        raise ValueError(
            f"tile sizes ({tb}, {tn}, {tk}) must divide (B, O, I)=({B}, {O}, {I})")
    if not (tb == B or tb % sub_align == 0):
        raise ValueError(f"tile_b={tb} must be a multiple of {sub_align} or equal B={B}")
    if not (tn == O or tn % 128 == 0):
        raise ValueError(f"tile_n={tn} must be a multiple of 128 or equal O={O}")
    if not (tk == I or tk % 128 == 0):
        raise ValueError(f"tile_k={tk} must be a multiple of 128 or equal I={I}")

    out_shape = jax.ShapeDtypeStruct((B, O), x.dtype)

    if tk == I:
        # ---- Full-K fast path: 2-D "parallel" grid, no accumulator ----
        needed = (2 * (tb * I + tn * I + tn) * in_itemsize
                  + 2 * tb * tn * out_itemsize)
        vmem_limit = int(min(max(budget, needed + (2 << 20)), capacity))
        kernel = functools.partial(_linear_sigmoid_2d_kernel,
                                   cast_bf16=bf16_matmul)
        return pl.pallas_call(
            kernel,
            out_shape=out_shape,
            grid_spec=pltpu.PrefetchScalarGridSpec(
                num_scalar_prefetch=0,
                grid=(B // tb, O // tn),
                in_specs=[
                    pl.BlockSpec((tb, I), lambda i, j: (i, 0)),   # x tile
                    pl.BlockSpec((tn, I), lambda i, j: (j, 0)),   # weight (O, I)
                    pl.BlockSpec((1, tn), lambda i, j: (0, j)),   # bias tile
                ],
                out_specs=pl.BlockSpec((tb, tn), lambda i, j: (i, j)),
            ),
            compiler_params=pltpu.CompilerParams(
                dimension_semantics=("parallel", "parallel"),
                vmem_limit_bytes=vmem_limit,
            ),
        )(x, weight, b2)

    # ---- K-tiled path: 3-D grid, K last / "arbitrary", f32 accumulator ----
    needed = (2 * (tb * tk + tn * tk + tn) * in_itemsize
              + 2 * tb * tn * out_itemsize
              + tb * tn * 4)
    vmem_limit = int(min(max(budget, needed + (2 << 20)), capacity))
    kernel = functools.partial(_linear_sigmoid_3d_kernel, cast_bf16=bf16_matmul)
    return pl.pallas_call(
        kernel,
        out_shape=out_shape,
        grid_spec=pltpu.PrefetchScalarGridSpec(
            num_scalar_prefetch=0,
            grid=(B // tb, O // tn, I // tk),
            in_specs=[
                pl.BlockSpec((tb, tk), lambda i, j, k: (i, k)),   # x tile
                pl.BlockSpec((tn, tk), lambda i, j, k: (j, k)),   # weight (O, I)
                pl.BlockSpec((1, tn), lambda i, j, k: (0, j)),    # bias tile
            ],
            out_specs=pl.BlockSpec((tb, tn), lambda i, j, k: (i, j)),
            scratch_shapes=[pltpu.VMEM((tb, tn), jnp.float32)],
        ),
        compiler_params=pltpu.CompilerParams(
            dimension_semantics=("parallel", "parallel", "arbitrary"),
            vmem_limit_bytes=vmem_limit,
        ),
    )(x, weight, b2)


# ---------------------------------------------------------------------------
# Self-test
# ---------------------------------------------------------------------------

if __name__ == "__main__":
    key = jax.random.PRNGKey(0)

    # ---- Test 1: NET(inputs=32, outputs=16), batch=8 (auto full-K path) ----
    batch, inputs, outputs = 8, 32, 16
    kx, kw, kb = jax.random.split(key, 3)
    x = jax.random.normal(kx, (batch, inputs), dtype=jnp.float32)
    bound = 1.0 / jnp.sqrt(jnp.float32(inputs))
    weight = jax.random.uniform(kw, (outputs, inputs), jnp.float32, -bound, bound)
    bias = jax.random.uniform(kb, (outputs,), jnp.float32, -bound, bound)

    out = jax.block_until_ready(net_forward(x, weight, bias))
    ref = jax.nn.sigmoid(x @ weight.T + bias)
    assert out.shape == (batch, outputs)
    assert jnp.allclose(out, ref, atol=1e-5, rtol=1e-5)

    # ---- Test 2: moderate shapes, auto plan (full-K, 2-D parallel grid) ----
    B2, I2, O2 = 256, 512, 256
    k2x, k2w, k2b = jax.random.split(jax.random.PRNGKey(1), 3)
    x2 = jax.random.normal(k2x, (B2, I2), dtype=jnp.float32)
    bound2 = 1.0 / jnp.sqrt(jnp.float32(I2))
    w2 = jax.random.uniform(k2w, (O2, I2), jnp.float32, -bound2, bound2)
    b2 = jax.random.uniform(k2b, (O2,), jnp.float32, -bound2, bound2)
    ref2 = jax.nn.sigmoid(x2 @ w2.T + b2)

    out2 = jax.block_until_ready(net_forward(x2, w2, b2))
    assert out2.shape == (B2, O2)
    assert jnp.allclose(out2, ref2, atol=1e-5, rtol=1e-5)

    # ---- Test 3: same shapes, explicit tiles exercising the K-tiled path ----
    out3 = jax.block_until_ready(
        net_forward(x2, w2, b2, tile_b=128, tile_n=128, tile_k=128))
    assert out3.shape == (B2, O2)
    assert jnp.allclose(out3, ref2, atol=1e-5, rtol=1e-5)

    print("KERNEL_OK")
</pallas_src>

<mosaic_0001>
module attributes {stable_mosaic.version = 11 : i64} {
  func.func @_linear_sigmoid_2d_kernel(%arg0: i32, %arg1: i32, %arg2: memref<8x32xf32, #tpu.memory_space<vmem>>, %arg3: memref<16x32xf32, #tpu.memory_space<vmem>>, %arg4: memref<1x16xf32, #tpu.memory_space<vmem>>, %arg5: memref<8x16xf32, #tpu.memory_space<vmem>>) attributes {dimension_semantics = [#tpu.dimension_semantics<parallel>, #tpu.dimension_semantics<parallel>], iteration_bounds = array<i64: 1, 1>, scalar_prefetch = 0 : i64, scratch_operands = 0 : i64, tpu.core_type = #tpu.core_type<tc>, window_params = [{transform_indices = @transform_0, window_bounds = array<i64: 8, 32>}, {transform_indices = @transform_1, window_bounds = array<i64: 16, 32>}, {transform_indices = @transform_2, window_bounds = array<i64: 1, 16>}, {transform_indices = @transform_3, window_bounds = array<i64: 8, 16>}]} {
    %c0 = arith.constant 0 : index
    %c0_0 = arith.constant 0 : index
    %0 = vector.load %arg2[%c0, %c0_0] : memref<8x32xf32, #tpu.memory_space<vmem>>, vector<8x32xf32>
    %c0_1 = arith.constant 0 : index
    %c0_2 = arith.constant 0 : index
    %1 = vector.load %arg3[%c0_1, %c0_2] : memref<16x32xf32, #tpu.memory_space<vmem>>, vector<16x32xf32>
    %cst = arith.constant dense<0.000000e+00> : vector<8x16xf32>
    %2 = tpu.matmul %0, %1, %cst {dimension_numbers = #tpu.dot_dimension_numbers<[1], [1], [0], [0], [0, 0, 1, 0], [], []>} : vector<8x32xf32>, vector<16x32xf32>, vector<8x16xf32> -> vector<8x16xf32>
    %c0_3 = arith.constant 0 : index
    %c0_4 = arith.constant 0 : index
    %3 = vector.load %arg4[%c0_3, %c0_4] : memref<1x16xf32, #tpu.memory_space<vmem>>, vector<1x16xf32>
    %4 = vector.broadcast %3 : vector<1x16xf32> to vector<8x16xf32>
    %5 = arith.addf %2, %4 : vector<8x16xf32>
    %6 = arith.negf %5 : vector<8x16xf32>
    %7 = math.exp %6 : vector<8x16xf32>
    %cst_5 = arith.constant 1.000000e+00 : f32
    %8 = vector.broadcast %cst_5 : f32 to vector<8x16xf32>
    %9 = arith.addf %8, %7 : vector<8x16xf32>
    %10 = arith.divf %8, %9 : vector<8x16xf32>
    %c0_6 = arith.constant 0 : index
    %c0_7 = arith.constant 0 : index
    %11 = vector.load %arg5[%c0_6, %c0_7] : memref<8x16xf32, #tpu.memory_space<vmem>>, vector<8x16xf32>
    tpu.vector_store %arg5[%c0_6, %c0_7], %10 {strides = array<i32>} : memref<8x16xf32, #tpu.memory_space<vmem>>, vector<8x16xf32>,
    return
  }
  func.func @transform_0(%arg0: i32, %arg1: i32) -> (i32, i32) {
    %c0_i32 = arith.constant 0 : i32
    %c0_i32_0 = arith.constant 0 : i32
    return %arg0, %c0_i32 : i32, i32
  }
  func.func @transform_1(%arg0: i32, %arg1: i32) -> (i32, i32) {
    %c0_i32 = arith.constant 0 : i32
    %c0_i32_0 = arith.constant 0 : i32
    return %arg1, %c0_i32 : i32, i32
  }
  func.func @transform_2(%arg0: i32, %arg1: i32) -> (i32, i32) {
    %c0_i32 = arith.constant 0 : i32
    %c0_i32_0 = arith.constant 0 : i32
    return %c0_i32, %arg1 : i32, i32
  }
  func.func @transform_3(%arg0: i32, %arg1: i32) -> (i32, i32) {
    %c0_i32 = arith.constant 0 : i32
    return %arg0, %arg1 : i32, i32
  }
}

</mosaic_0001>

<llo_original>
// kernel: net_forward.1
$region0: #{net_forward.1}
  #allocation0 [shape = 'u32[]', space=smem, size = 0x4, offset = 0x4, fixed_abs, tag = 'smem constant byte address 0x4 - core index']
  #allocation1 [shape = 'u32[144,128]{1,0:T(1,128)}', space=vmem, size = 0x12000, scoped, tag = 'internal scratch']
  %s0 = inlined_call_operand.hbm [shape: f32[8,32], index: 0, kind: input, shape index: {}]
  %s1 = inlined_call_operand.hbm [shape: f32[16,32], index: 1, kind: input, shape index: {}]
  %s2 = inlined_call_operand.vmem [shape: f32[1,16], index: 2, kind: input, shape index: {}]
  %s3 = inlined_call_operand.hbm [shape: f32[8,16], index: 3, kind: output, shape index: {}]
  %s4 = sld [smem:[#allocation0]]
  $region30: #{net_forward.1} parent=0
    _
  %s6 = ssub.s32 1, %s4
  %s7 = scalar_select 0, %s6, %s4
  $region1: #{net_forward.1} parent=0
    #allocation2 [shape = 'u8[4096]{0}', space=vmem, size = 0x1000, scoped, tag = 'input window, operand 0, single buffered']
    #allocation3 [shape = 's32[1]{0}', space=sflag, size = 0x4, scoped, tag = 'scoped memory for net_forward.1']
    #allocation4 [shape = 's32[1]{0}', space=sflag, size = 0x4, scoped, tag = 'scoped memory for net_forward.1']
    #allocation5 [shape = 'u8[8192]{0}', space=vmem, size = 0x2000, scoped, tag = 'input window, operand 1, single buffered']
    #allocation6 [shape = 's32[1]{0}', space=sflag, size = 0x4, scoped, tag = 'scoped memory for net_forward.1']
    #allocation7 [shape = 'u8[4096]{0}', space=vmem, size = 0x1000, scoped, tag = 'output window, operand 0, single buffered']
    %8 = vsyncpa [#allocation3], 0
    %9 = vsyncpa [#allocation6], 0
    %10 = vsyncpa [#allocation4], 0
    // Predicated region
    $region2: #{net_forward.1} parent=1 // pred_check
      _
    $region3: #{net_forward.1} parent=1 // pred_check_branch
      %12 = sbr.rel (0) target = $region5
    $region4: #{net_forward.1} parent=1 // pred_region
      %s14 = ssub.s32 128, 128
      %15 = vsyncadd [#allocation3], %s14
      %s17 = sshll.u32 [#allocation2], 4
      %s18 = int_to_ptr.vmem [resolvable:$true] %s17
      %20 = dma.hbm_to_vmem [thread:$0]  %s0, 128, %s18, [#allocation3]
    $region5: #{net_forward.1} parent=1 // pred_fallthru
      _
    // Predicated region
    $region6: #{net_forward.1} parent=1 // pred_check
      _
    $region7: #{net_forward.1} parent=1 // pred_check_branch
      %22 = sbr.rel (0) target = $region9
    $region8: #{net_forward.1} parent=1 // pred_region
      %s24 = ssub.s32 256, 256
      %25 = vsyncadd [#allocation6], %s24
      %s26 = sshll.u32 [#allocation5], 4
      %s27 = int_to_ptr.vmem [resolvable:$true] %s26
      %32 = dma.hbm_to_vmem [thread:$0]  %s1, 256, %s27, [#allocation6], 128, 128, 8
    $region9: #{net_forward.1} parent=1 // pred_fallthru
      _
    // Predicated region
    $region10: #{net_forward.1} parent=1 // pred_check
      _
    $region11: #{net_forward.1} parent=1 // pred_check_branch
      %34 = sbr.rel (0) target = $region13
    $region12: #{net_forward.1} parent=1 // pred_region
      _
    $region13: #{net_forward.1} parent=1 // pred_fallthru
      _
    // Predicated region
    $region14: #{net_forward.1} parent=1 // pred_check
      _
    $region15: #{net_forward.1} parent=1 // pred_check_branch
      %36 = sbr.rel (0) target = $region17
    $region16: #{net_forward.1} parent=1 // pred_region
      %37 = dma.done [#allocation3], 128
    $region17: #{net_forward.1} parent=1 // pred_fallthru
      _
    // Predicated region
    $region18: #{net_forward.1} parent=1 // pred_check
      _
    $region19: #{net_forward.1} parent=1 // pred_check_branch
      %39 = sbr.rel (0) target = $region21
    $region20: #{net_forward.1} parent=1 // pred_region
      %40 = dma.done [#allocation6], 256
    $region21: #{net_forward.1} parent=1 // pred_fallthru
      _
    %v41 = vld [vmem:[#allocation2] sm:$0xff]
    %v42 = vld [vmem:[#allocation5] sm:$0xff]
    %v43 = vld [vmem:[#allocation5 + $0x8] sm:$0xff]
    %v44 = vld [vmem:[%s2] sm:$0x1]
    %v46 = vlaneseq
    %v47 = vshrl.u32 %v46, 7
    %v48 = vsub.s32 0, %v47
    %v49 = vrot.slane %v44, %v48
    %vm51 = vcmask 261120
    %v53 = vsel %vm51, %v41, 0
    %v56 = vsel %vm51, %v42, 0
    %v59 = vsel %vm51, %v43, 0
    %61 = vmatprep.subr.mxu0 0.0
    %62 = vmatpush1.xpose.msra.mxu0 %v56
    %63 = vmatprep.subr.mxu0 0.0
    %64 = vmatpush1.xpose.msra.mxu0 %v59
    %65 = vmatprep.subr.mxu0 0.0
    %66 = vmatpush1.xpose.msra.mxu0 0.0
    %67 = vmatprep.subr.mxu0 0.0
    %68 = vmatpush1.xpose.msra.mxu0 0.0
    %69 = vmatprep.subr.mxu0 0.0
    %70 = vmatpush1.xpose.msra.mxu0 0.0
    %71 = vmatprep.subr.mxu0 0.0
    %72 = vmatpush1.xpose.msra.mxu0 0.0
    %73 = vmatprep.subr.mxu0 0.0
    %74 = vmatpush1.xpose.msra.mxu0 0.0
    %75 = vmatprep.subr.mxu0 0.0
    %76 = vmatpush1.xpose.msra.mxu0 0.0
    %77 = vmatprep.subr.mxu0 0.0
    %78 = vmatpush1.xpose.msra.mxu0 0.0
    %79 = vmatprep.subr.mxu0 0.0
    %80 = vmatpush1.xpose.msra.mxu0 0.0
    %81 = vmatprep.subr.mxu0 0.0
    %82 = vmatpush1.xpose.msra.mxu0 0.0
    %83 = vmatprep.subr.mxu0 0.0
    %84 = vmatpush1.xpose.msra.mxu0 0.0
    %85 = vmatprep.subr.mxu0 0.0
    %86 = vmatpush1.xpose.msra.mxu0 0.0
    %87 = vmatprep.subr.mxu0 0.0
    %88 = vmatpush1.xpose.msra.mxu0 0.0
    %89 = vmatprep.subr.mxu0 0.0
    %90 = vmatpush1.xpose.msra.mxu0 0.0
    %91 = vmatprep.subr.mxu0 0.0
    %92 = vmatpush1.xpose.msra.mxu0 0.0
    %93 = vmatprep.subr.mxu0 0.0
    %94 = vmatpush1.xpose.msra.mxu0 0.0
    %95 = vmatprep.subr.mxu0 0.0
    %96 = vmatpush1.xpose.msra.mxu0 0.0
    %97 = vmatprep.subr.mxu0 0.0
    %98 = vmatpush1.xpose.msra.mxu0 0.0
    %99 = vmatprep.subr.mxu0 0.0
    %100 = vmatpush1.xpose.msra.mxu0 0.0
    %101 = vmatprep.subr.mxu0 0.0
    %102 = vmatpush1.xpose.msra.mxu0 0.0
    %103 = vmatprep.subr.mxu0 0.0
    %104 = vmatpush1.xpose.msra.mxu0 0.0
    %105 = vmatprep.subr.mxu0 0.0
    %106 = vmatpush1.xpose.msra.mxu0 0.0
    %107 = vmatprep.subr.mxu0 0.0
    %108 = vmatpush1.xpose.msra.mxu0 0.0
    %109 = vmatprep.subr.mxu0 0.0
    %110 = vmatpush1.xpose.msra.mxu0 0.0
    %111 = vmatprep.subr.mxu0 0.0
    %112 = vmatpush1.xpose.msra.mxu0 0.0
    %113 = vmatprep.subr.mxu0 0.0
    %114 = vmatpush1.xpose.msra.mxu0 0.0
    %115 = vmatprep.subr.mxu0 0.0
    %116 = vmatpush1.xpose.msra.mxu0 0.0
    %117 = vmatprep.subr.mxu0 0.0
    %118 = vmatpush1.xpose.msra.mxu0 0.0
    %119 = vmatprep.subr.mxu0 0.0
    %120 = vmatpush1.xpose.msra.mxu0 0.0
    %121 = vmatprep.subr.mxu0 0.0
    %122 = vmatpush1.xpose.msra.mxu0 0.0
    %123 = vmatprep.subr.mxu0 0.0
    %124 = vmatpush1.xpose.msra.mxu0 0.0
    %125 = vmatprep.mubr.f32.mxu0 0.0
    %126 = vmatmul.mubr.f32.gmra.mrb[0].mxu0 %v53
    %v127 = vpop.f32.mrb[0].mxu0
    %v128 = vadd.f32 %v49, %v127
    %v129 = vpop.f32.mrb[0].mxu0
    %130 = vdwg.mxu0
    %v131 = vxor.u32 %v128, 2147483648
    %v132 = vmul.f32 %v131, 1.442695
    %v133 = vpow.pop %v132
    %v134 = vadd.f32 %v133, 1.0
    %v135 = vrcp.pop %v134
    %v136 = vmul.f32 1.0, %v135
    %vm137 = vcmask 130048
    %138 = vst.msk [vmem:[#allocation7] sm:$0xff] %vm137, %v136
    // Predicated region
    $region22: #{net_forward.1} parent=1 // pred_check
      _
    $region23: #{net_forward.1} parent=1 // pred_check_branch
      %140 = sbr.rel (0) target = $region25
    $region24: #{net_forward.1} parent=1 // pred_region
      %s142 = ssub.s32 128, 128
      %143 = vsyncadd [#allocation4], %s142
      %s145 = sshll.u32 [#allocation7], 4
      %s146 = int_to_ptr.vmem [resolvable:$true] %s145
      %148 = dma.vmem_to_hbm [thread:$0]  %s146, 128, %s3, [#allocation4]
    $region25: #{net_forward.1} parent=1 // pred_fallthru
      _
    // Predicated region
    $region26: #{net_forward.1} parent=1 // pred_check
      _
    $region27: #{net_forward.1} parent=1 // pred_check_branch
      %150 = sbr.rel (0) target = $region29
    $region28: #{net_forward.1} parent=1 // pred_region
      %151 = dma.done [#allocation4], 128
    $region29: #{net_forward.1} parent=1 // pred_fallthru
      _
    %152 = vsyncpa [#allocation3], 1
    %153 = vsyncpa [#allocation6], 1
    %154 = vsyncpa [#allocation4], 1

</llo_original>
